<compile_context>
chip_gen: v7x
topology: tpu7x:2x2x1
jax: 0.10.0
libtpu: 0.0.40
codegen_flags: <defaults>
</compile_context>

<pallas_src>
import functools
import math

import jax
import jax.numpy as jnp
from jax import lax
from jax.experimental import pallas as pl
from jax.experimental.pallas import tpu as pltpu

_GELU_C = math.sqrt(2.0 / math.pi)


def _round_up(x, m):
    return ((x + m - 1) // m) * m


def _cdiv(a, b):
    return (a + b - 1) // b


def _default_vmem_limit():
    """Chip-aware vmem_limit_bytes: ~96 MiB on v5e/v6e (128 MiB physical), ~48 MiB on v7x."""
    try:
        cap = int(pltpu.get_tpu_info().vmem_capacity_bytes)
    except Exception:
        return 48 * 1024 * 1024
    if cap >= 100 * 1024 * 1024:
        return 96 * 1024 * 1024
    return min(48 * 1024 * 1024, cap * 3 // 4)


# ----------------------------------------------------------------------------
# FeedForward: out = NewGELU(x @ W1 + b1) @ W2 + b2    (dropout = identity, eval)
# ----------------------------------------------------------------------------
def _new_gelu_f32(h):
    # NewGELU, f32.  Polynomial rewritten (h*(1+a*h^2)) to trim VALU multiplies;
    # tanh lands on the EUP slot.
    h2 = h * h
    inner = (_GELU_C * h) * (1.0 + 0.044715 * h2)
    return h * (0.5 + 0.5 * jnp.tanh(inner))


def _ffn_kernel_resident(x_ref, w1_ref, b1_ref, w2_ref, b2_ref, o_ref):
    """Whole d_ff in one shot; W1/W2 stay VMEM-resident across row tiles."""
    h = jnp.dot(x_ref[...], w1_ref[...], preferred_element_type=jnp.float32)
    h = h + b1_ref[...]
    g = _new_gelu_f32(h)
    out = jnp.dot(g.astype(w2_ref.dtype), w2_ref[...],
                  preferred_element_type=jnp.float32)
    o_ref[...] = (out + b2_ref[...]).astype(o_ref.dtype)


def _ffn_kernel_streamed(x_ref, w1_ref, b1_ref, w2_ref, b2_ref, o_ref, acc_ref):
    """d_ff streamed over the k grid axis; f32 accumulator in VMEM scratch."""
    k = pl.program_id(1)

    @pl.when(k == 0)
    def _():
        acc_ref[...] = jnp.zeros_like(acc_ref)

    h = jnp.dot(x_ref[...], w1_ref[...], preferred_element_type=jnp.float32)
    h = h + b1_ref[...]
    g = _new_gelu_f32(h)
    acc_ref[...] += jnp.dot(g.astype(w2_ref.dtype), w2_ref[...],
                            preferred_element_type=jnp.float32)

    @pl.when(k == pl.num_programs(1) - 1)
    def _():
        o_ref[...] = (acc_ref[...] + b2_ref[...]).astype(o_ref.dtype)


def prepare_ffn_params(w1, b1, w2, b2, *, compute_dtype=None):
    """Pad + cast the FFN weights ONCE (not per call).  Biases stay f32."""
    d_model, d_ff = w1.shape
    if compute_dtype is None:
        # f32 has no native MXU path on v5e/v6e/v7x -> feed bf16, accumulate f32.
        compute_dtype = jnp.bfloat16 if w1.dtype == jnp.float32 else w1.dtype
    d_model_p = _round_up(d_model, 128)
    d_ff_p = _round_up(d_ff, 128)
    w1_p = jnp.pad(w1, ((0, d_model_p - d_model), (0, d_ff_p - d_ff))).astype(compute_dtype)
    w2_p = jnp.pad(w2, ((0, d_ff_p - d_ff), (0, d_model_p - d_model))).astype(compute_dtype)
    b1_p = jnp.pad(b1.reshape(1, d_ff).astype(jnp.float32), ((0, 0), (0, d_ff_p - d_ff)))
    b2_p = jnp.pad(b2.reshape(1, d_model).astype(jnp.float32), ((0, 0), (0, d_model_p - d_model)))
    return dict(w1=w1_p, b1=b1_p, w2=w2_p, b2=b2_p,
                d_model=d_model, d_ff=d_ff, d_model_p=d_model_p, d_ff_p=d_ff_p,
                compute_dtype=compute_dtype)


def _pick_tff(d_ff_p, target):
    """Largest multiple of 128 that divides d_ff_p and is <= target (min 128)."""
    best, t = 128, 128
    while t <= d_ff_p:
        if d_ff_p % t == 0 and t <= target:
            best = t
        t += 128
    return best


def feed_forward(x, p, *, block_rows=None, block_ff=None, vmem_limit_bytes=None):
    """x: [..., d_model]; p: prepare_ffn_params(...) output."""
    d_model, d_model_p, d_ff_p = p["d_model"], p["d_model_p"], p["d_ff_p"]
    cdt = p["compute_dtype"]
    assert x.shape[-1] == d_model

    orig_shape = x.shape
    x2d = x.reshape(-1, d_model)
    M = x2d.shape[0]
    out_dtype = x.dtype

    in_isz = jnp.dtype(cdt).itemsize
    out_isz = jnp.dtype(out_dtype).itemsize
    w_isz = jnp.dtype(p["w1"].dtype).itemsize

    if vmem_limit_bytes is None:
        vmem_limit_bytes = _default_vmem_limit()
    budget = int(vmem_limit_bytes * 0.8)          # headroom for compiler scratch

    if block_rows is None:
        # Fat row tiles on 128-MiB-VMEM chips (v5e/v6e); 512 on v7x.
        block_rows = 1024 if vmem_limit_bytes >= 80 * 1024 * 1024 else 512
    block_rows = max(8, _round_up(block_rows, 8))

    # --- d_ff tiling: collapse the k axis (weights VMEM-resident) when they fit.
    if block_ff is not None:
        target_ff = max(128, block_ff)
    else:
        weights_fit = 2 * (2 * d_model_p * d_ff_p * w_isz) <= budget // 2
        target_ff = d_ff_p if weights_fit else 512
    tff = _pick_tff(d_ff_p, target_ff)

    # --- row tiling against the explicit VMEM budget.
    M8 = _round_up(M, 8)
    tm = min(block_rows, M8)

    def vmem_need(tm_, tff_):
        n = 2 * tm_ * d_model_p * (in_isz + out_isz)        # x + out double buffers
        n += 2 * 2 * d_model_p * tff_ * w_isz               # W1 + W2 double buffers
        n += 2 * (tff_ + d_model_p) * 4                     # biases
        n += tm_ * d_model_p * 4                            # f32 accumulator scratch
        n += 2 * tm_ * tff_ * 4                             # f32 h / g intermediates
        return n

    while vmem_need(tm, tff) > budget and tm > 8:
        tm = max(8, _round_up(tm // 2, 8))
    while vmem_need(tm, tff) > budget and tff > 128:
        new_tff = _pick_tff(d_ff_p, tff - 128)
        if new_tff == tff:
            break
        tff = new_tff

    # v7x megacore: keep at least two "parallel" row tiles when there is work.
    if M8 >= 16:
        tm = min(tm, _round_up(_cdiv(M8, 2), 8))

    M_p = _round_up(M8, tm)
    n_i, n_k = M_p // tm, d_ff_p // tff

    # Only the activations are padded (and cast) per call; weights were done at init.
    x_p = jnp.pad(x2d.astype(cdt), ((0, M_p - M), (0, d_model_p - d_model)))

    # Advisory cost estimate: per-array itemsizes, weight re-streaming accounted.
    w_bytes = 2 * d_model_p * d_ff_p * w_isz
    weight_reads = 1 if n_k == 1 else n_i
    cost = pl.CostEstimate(
        flops=4 * M_p * d_model_p * d_ff_p,
        transcendentals=M_p * d_ff_p,
        bytes_accessed=int(x_p.size * in_isz + w_bytes * weight_reads
                           + (d_ff_p + d_model_p) * 4
                           + M_p * d_model_p * out_isz),
    )

    if n_k == 1:
        # Grid-invariant weight index maps -> W1/W2 fetched once, held in VMEM.
        grid = (n_i,)
        in_specs = [
            pl.BlockSpec((tm, d_model_p), lambda i: (i, 0)),
            pl.BlockSpec((d_model_p, tff), lambda i: (0, 0)),
            pl.BlockSpec((1, tff), lambda i: (0, 0)),
            pl.BlockSpec((tff, d_model_p), lambda i: (0, 0)),
            pl.BlockSpec((1, d_model_p), lambda i: (0, 0)),
        ]
        out_specs = pl.BlockSpec((tm, d_model_p), lambda i: (i, 0))
        kernel = _ffn_kernel_resident
        scratch = []
        dim_sem = ("parallel",)
    else:
        # Streaming d_ff: triple-buffer the k-streamed weight tiles if they fit.
        extra = 2 * d_model_p * tff * w_isz
        w_pipe = (dict(pipeline_mode=pl.Buffered(3))
                  if vmem_need(tm, tff) + extra <= budget else {})
        grid = (n_i, n_k)
        in_specs = [
            pl.BlockSpec((tm, d_model_p), lambda i, k: (i, 0)),
            pl.BlockSpec((d_model_p, tff), lambda i, k: (0, k), **w_pipe),
            pl.BlockSpec((1, tff), lambda i, k: (0, k)),
            pl.BlockSpec((tff, d_model_p), lambda i, k: (k, 0), **w_pipe),
            pl.BlockSpec((1, d_model_p), lambda i, k: (0, 0)),
        ]
        out_specs = pl.BlockSpec((tm, d_model_p), lambda i, k: (i, 0))
        kernel = _ffn_kernel_streamed
        scratch = [pltpu.VMEM((tm, d_model_p), jnp.float32)]
        dim_sem = ("parallel", "arbitrary")

    out = pl.pallas_call(
        kernel,
        out_shape=jax.ShapeDtypeStruct((M_p, d_model_p), out_dtype),
        grid_spec=pltpu.PrefetchScalarGridSpec(
            num_scalar_prefetch=0,
            grid=grid,
            in_specs=in_specs,
            out_specs=out_specs,
            scratch_shapes=scratch,
        ),
        compiler_params=pltpu.CompilerParams(
            dimension_semantics=dim_sem,
            vmem_limit_bytes=vmem_limit_bytes),
        cost_estimate=cost,
    )(x_p, p["w1"], p["b1"], p["w2"], p["b2"])

    return out[:M, :d_model].reshape(orig_shape)


# ----------------------------------------------------------------------------
# Norm:  alpha * (x - mean) / (std_unbiased + eps) + bias     (torch.std: ddof=1)
# ----------------------------------------------------------------------------
def _norm_kernel(x_ref, alpha_ref, bias_ref, o_ref, *, eps):
    x = x_ref[...].astype(jnp.float32)
    d = x.shape[-1]
    mean = jnp.mean(x, axis=-1, keepdims=True)
    xc = x - mean
    var = jnp.sum(xc * xc, axis=-1, keepdims=True) / (d - 1)   # unbiased, like torch
    std = jnp.sqrt(var)
    y = alpha_ref[...].astype(jnp.float32) * xc / (std + eps) + bias_ref[...].astype(jnp.float32)
    o_ref[...] = y.astype(o_ref.dtype)


def layer_norm(x, alpha, bias, *, eps=1e-6, block_rows=512):
    orig = x.shape
    d = orig[-1]
    x2 = x.reshape(-1, d)
    M = x2.shape[0]
    M8 = _round_up(M, 8)
    tm = min(_round_up(block_rows, 8), M8)
    M_p = _round_up(M8, tm)
    x_p = jnp.pad(x2, ((0, M_p - M), (0, 0)))
    out = pl.pallas_call(
        functools.partial(_norm_kernel, eps=eps),
        out_shape=jax.ShapeDtypeStruct((M_p, d), x.dtype),
        grid=(M_p // tm,),
        in_specs=[pl.BlockSpec((tm, d), lambda i: (i, 0)),
                  pl.BlockSpec((1, d), lambda i: (0, 0)),
                  pl.BlockSpec((1, d), lambda i: (0, 0))],
        out_specs=pl.BlockSpec((tm, d), lambda i: (i, 0)),
        compiler_params=pltpu.CompilerParams(dimension_semantics=("parallel",)),
    )(x_p, alpha.reshape(1, d), bias.reshape(1, d))
    return out[:M].reshape(orig)


# ----------------------------------------------------------------------------
# Linear:  x @ W + b    (Q/K/V/out projections; W kept full-block / grid-invariant)
# ----------------------------------------------------------------------------
def _linear_kernel(x_ref, w_ref, b_ref, o_ref):
    acc = jnp.dot(x_ref[...], w_ref[...], preferred_element_type=jnp.float32)
    o_ref[...] = (acc + b_ref[...].astype(jnp.float32)).astype(o_ref.dtype)


def linear(x, w, b, *, block_rows=512):
    orig = x.shape
    d_in, d_out = w.shape
    x2 = x.reshape(-1, d_in)
    M = x2.shape[0]
    M8 = _round_up(M, 8)
    tm = min(_round_up(block_rows, 8), M8)
    M_p = _round_up(M8, tm)
    x_p = jnp.pad(x2, ((0, M_p - M), (0, 0)))
    out = pl.pallas_call(
        _linear_kernel,
        out_shape=jax.ShapeDtypeStruct((M_p, d_out), x.dtype),
        grid=(M_p // tm,),
        in_specs=[pl.BlockSpec((tm, d_in), lambda i: (i, 0)),
                  pl.BlockSpec((d_in, d_out), lambda i: (0, 0)),
                  pl.BlockSpec((1, d_out), lambda i: (0, 0))],
        out_specs=pl.BlockSpec((tm, d_out), lambda i: (i, 0)),
        compiler_params=pltpu.CompilerParams(dimension_semantics=("parallel",)),
    )(x_p, w, b.reshape(1, d_out))
    return out[:M].reshape(orig[:-1] + (d_out,))


# ----------------------------------------------------------------------------
# Attention core: softmax(q k^T / sqrt(dk) + mask_bias) @ v,  one (batch, head)
# per grid step.
# ----------------------------------------------------------------------------
def _attn_kernel(q_ref, k_ref, v_ref, mb_ref, o_ref, *, scale):
    q = q_ref[0].astype(jnp.float32)
    k = k_ref[0].astype(jnp.float32)
    v = v_ref[0]
    s = lax.dot_general(q, k, (((1,), (1,)), ((), ())),
                        preferred_element_type=jnp.float32) * scale
    s = s + mb_ref[0]
    s = s - jnp.max(s, axis=-1, keepdims=True)
    p = jnp.exp(s)
    p = p / jnp.sum(p, axis=-1, keepdims=True)
    # dropout on the attention weights: identity (eval mode).
    o = jnp.dot(p.astype(v.dtype), v, preferred_element_type=jnp.float32)
    o_ref[0] = o.astype(o_ref.dtype)


def _attention(qh, kh, vh, mask_bias, nhead, dk):
    BH, S, _ = qh.shape
    return pl.pallas_call(
        functools.partial(_attn_kernel, scale=1.0 / math.sqrt(dk)),
        out_shape=jax.ShapeDtypeStruct((BH, S, dk), qh.dtype),
        grid=(BH,),
        in_specs=[
            pl.BlockSpec((1, S, dk), lambda bh: (bh, 0, 0)),
            pl.BlockSpec((1, S, dk), lambda bh: (bh, 0, 0)),
            pl.BlockSpec((1, S, dk), lambda bh: (bh, 0, 0)),
            pl.BlockSpec((1, S, S), lambda bh: (bh // nhead, 0, 0)),   # shared per batch
        ],
        out_specs=pl.BlockSpec((1, S, dk), lambda bh: (bh, 0, 0)),
        compiler_params=pltpu.CompilerParams(dimension_semantics=("parallel",)),
    )(qh, kh, vh, mask_bias)


def multi_head_attention(x, lp, mask_bias, nhead):
    B, S, D = x.shape
    dk = D // nhead
    q = linear(x, lp["wq"], lp["bq"])
    k = linear(x, lp["wk"], lp["bk"])
    v = linear(x, lp["wv"], lp["bv"])

    def split_heads(t):
        return t.reshape(B, S, nhead, dk).transpose(0, 2, 1, 3).reshape(B * nhead, S, dk)

    o = _attention(split_heads(q), split_heads(k), split_heads(v), mask_bias, nhead, dk)
    o = o.reshape(B, nhead, S, dk).transpose(0, 2, 1, 3).reshape(B, S, D)
    return linear(o, lp["wo"], lp["bo"])


# ----------------------------------------------------------------------------
# Transformer (Encoder with N EncoderLayers + final Norm)
# ----------------------------------------------------------------------------
def _init_linear(key, d_in, d_out):
    kw, kb = jax.random.split(key)
    lim = 1.0 / math.sqrt(d_in)
    w = jax.random.uniform(kw, (d_in, d_out), jnp.float32, -lim, lim)
    b = jax.random.uniform(kb, (d_out,), jnp.float32, -lim, lim)
    return w, b


def init_transformer_params(key, d_model, nhead, num_layers, d_ff, *, ffn_compute_dtype=None):
    layers = []
    for _ in range(num_layers):
        key, kq, kk, kv, ko, k1, k2 = jax.random.split(key, 7)
        wq, bq = _init_linear(kq, d_model, d_model)
        wk, bk = _init_linear(kk, d_model, d_model)
        wv, bv = _init_linear(kv, d_model, d_model)
        wo, bo = _init_linear(ko, d_model, d_model)
        w1, b1 = _init_linear(k1, d_model, d_ff)
        w2, b2 = _init_linear(k2, d_ff, d_model)
        layers.append(dict(
            norm1_alpha=jnp.ones((d_model,), jnp.float32),
            norm1_bias=jnp.zeros((d_model,), jnp.float32),
            norm2_alpha=jnp.ones((d_model,), jnp.float32),
            norm2_bias=jnp.zeros((d_model,), jnp.float32),
            wq=wq, bq=bq, wk=wk, bk=bk, wv=wv, bv=bv, wo=wo, bo=bo,
            w1=w1, b1=b1, w2=w2, b2=b2,
            # FFN weights padded / cast to the MXU compute dtype ONCE, here.
            ffn=prepare_ffn_params(w1, b1, w2, b2, compute_dtype=ffn_compute_dtype),
        ))
    return dict(layers=layers, nhead=nhead,
                final_alpha=jnp.ones((d_model,), jnp.float32),
                final_bias=jnp.zeros((d_model,), jnp.float32))


def transformer_forward(params, src, src_mask, input_keep=None):
    del input_keep  # unused, as in the reference forward
    B, S, _ = src.shape
    if src_mask is None:
        mask_bias = jnp.zeros((B, S, S), jnp.float32)
    else:
        mask_bias = jnp.broadcast_to(
            jnp.where(src_mask == 0, -1e9, 0.0).astype(jnp.float32), (B, S, S))
    x = src
    for lp in params["layers"]:
        x2 = layer_norm(x, lp["norm1_alpha"], lp["norm1_bias"])
        x = x + multi_head_attention(x2, lp, mask_bias, params["nhead"])   # dropout_1: identity
        x2 = layer_norm(x, lp["norm2_alpha"], lp["norm2_bias"])
        x = x + feed_forward(x2, lp["ffn"])                                # dropout_2: identity
    return layer_norm(x, params["final_alpha"], params["final_bias"])


# ----------------------------------------------------------------------------
# Pure-JAX reference (mirrors the PyTorch module, eval mode, f32)
# ----------------------------------------------------------------------------
def _ref_norm(x, alpha, bias, eps=1e-6):
    mean = jnp.mean(x, axis=-1, keepdims=True)
    std = jnp.std(x, axis=-1, ddof=1, keepdims=True)     # torch.std -> unbiased
    return alpha * (x - mean) / (std + eps) + bias


def _ref_gelu(x):
    return 0.5 * x * (1.0 + jnp.tanh(_GELU_C * (x + 0.044715 * x ** 3)))


def _ref_ffn(x, w1, b1, w2, b2):
    return _ref_gelu(x @ w1 + b1) @ w2 + b2


def _ref_mha(x, lp, mask, nhead):
    B, S, D = x.shape
    dk = D // nhead

    def proj(w, b):
        return (x @ w + b).reshape(B, S, nhead, dk).transpose(0, 2, 1, 3)

    q, k, v = proj(lp["wq"], lp["bq"]), proj(lp["wk"], lp["bk"]), proj(lp["wv"], lp["bv"])
    scores = jnp.einsum("bhqd,bhkd->bhqk", q, k) / math.sqrt(dk)
    if mask is not None:
        scores = jnp.where(mask[:, None] == 0, -1e9, scores)
    p = jax.nn.softmax(scores, axis=-1)
    o = jnp.einsum("bhqk,bhkd->bhqd", p, v).transpose(0, 2, 1, 3).reshape(B, S, D)
    return o @ lp["wo"] + lp["bo"]


def _ref_transformer(params, src, mask):
    x = src
    for lp in params["layers"]:
        x2 = _ref_norm(x, lp["norm1_alpha"], lp["norm1_bias"])
        x = x + _ref_mha(x2, lp, mask, params["nhead"])
        x2 = _ref_norm(x, lp["norm2_alpha"], lp["norm2_bias"])
        x = x + _ref_ffn(x2, lp["w1"], lp["b1"], lp["w2"], lp["b2"])
    return _ref_norm(x, params["final_alpha"], params["final_bias"])


# ----------------------------------------------------------------------------
if __name__ == "__main__":
    key = jax.random.PRNGKey(0)
    k_src, k_par, k_ffn_x, k_ffn_p, k_ffn_x2 = jax.random.split(key, 5)

    d_model, nhead, num_layers, d_ff, dropout = 32, 4, 2, 64, 0.1
    B, S = 2, 8

    # --- standalone FeedForward kernel checks --------------------------------
    # (a) exact-math path (f32 MXU feeds), ragged rows exercise the M padding.
    xf = jax.random.normal(k_ffn_x, (2, 7, d_model), jnp.float32)
    w1, b1 = _init_linear(jax.random.fold_in(k_ffn_p, 0), d_model, d_ff)
    w2, b2 = _init_linear(jax.random.fold_in(k_ffn_p, 1), d_ff, d_model)
    ref_f = _ref_ffn(xf, w1, b1, w2, b2)

    p_f32 = prepare_ffn_params(w1, b1, w2, b2, compute_dtype=jnp.float32)
    out_f32 = jax.block_until_ready(feed_forward(xf, p_f32))
    assert out_f32.shape == ref_f.shape
    assert jnp.allclose(out_f32, ref_f, atol=1e-4, rtol=1e-4)

    # (b) default perf path: bf16 MXU feeds (looser tolerance, documented).
    p_bf16 = prepare_ffn_params(w1, b1, w2, b2)
    out_bf16 = jax.block_until_ready(feed_forward(xf, p_bf16))
    assert jnp.allclose(out_bf16, ref_f, atol=2e-2, rtol=2e-2)

    # (c) streamed-d_ff path (accumulator + Buffered weight pipeline), forced
    #     by an explicit block_ff smaller than d_ff.
    d_ff_big = 256
    w1b, b1b = _init_linear(jax.random.fold_in(k_ffn_p, 2), d_model, d_ff_big)
    w2b, b2b = _init_linear(jax.random.fold_in(k_ffn_p, 3), d_ff_big, d_model)
    xs = jax.random.normal(k_ffn_x2, (2, 8, d_model), jnp.float32)
    p_str = prepare_ffn_params(w1b, b1b, w2b, b2b, compute_dtype=jnp.float32)
    out_str = jax.block_until_ready(feed_forward(xs, p_str, block_ff=128))
    ref_str = _ref_ffn(xs, w1b, b1b, w2b, b2b)
    assert jnp.allclose(out_str, ref_str, atol=1e-4, rtol=1e-4)

    # --- full Transformer encoder forward (2 layers, with a masked key pos) --
    src = jax.random.normal(k_src, (B, S, d_model), jnp.float32)
    src_mask = jnp.ones((B, 1, S), jnp.int32).at[1, 0, S - 1].set(0)
    params = init_transformer_params(k_par, d_model, nhead, num_layers, d_ff)

    out = jax.block_until_ready(transformer_forward(params, src, src_mask, input_keep=None))
    ref_out = _ref_transformer(params, src, src_mask)
    assert out.shape == (B, S, d_model)
    # FFN runs bf16 on the MXU (f32 accumulation) -> loose tolerance vs f32 ref.
    assert jnp.allclose(out, ref_out, atol=3e-2, rtol=3e-2)

    print("KERNEL_OK")
</pallas_src>

<mosaic_0001>
module attributes {stable_mosaic.version = 11 : i64} {
  func.func @_ffn_kernel_resident(%arg0: i32, %arg1: memref<8x128xf32, #tpu.memory_space<vmem>>, %arg2: memref<128x128xf32, #tpu.memory_space<vmem>>, %arg3: memref<1x128xf32, #tpu.memory_space<vmem>>, %arg4: memref<128x128xf32, #tpu.memory_space<vmem>>, %arg5: memref<1x128xf32, #tpu.memory_space<vmem>>, %arg6: memref<8x128xf32, #tpu.memory_space<vmem>>) attributes {dimension_semantics = [#tpu.dimension_semantics<parallel>], iteration_bounds = array<i64: 2>, scalar_prefetch = 0 : i64, scratch_operands = 0 : i64, tpu.core_type = #tpu.core_type<tc>, window_params = [{transform_indices = @transform_0, window_bounds = array<i64: 8, 128>}, {pipeline_mode = #tpu.pipeline_mode<synchronous>, transform_indices = @transform_1, window_bounds = array<i64: 128, 128>}, {pipeline_mode = #tpu.pipeline_mode<synchronous>, transform_indices = @transform_2, window_bounds = array<i64: 1, 128>}, {pipeline_mode = #tpu.pipeline_mode<synchronous>, transform_indices = @transform_3, window_bounds = array<i64: 128, 128>}, {pipeline_mode = #tpu.pipeline_mode<synchronous>, transform_indices = @transform_4, window_bounds = array<i64: 1, 128>}, {transform_indices = @transform_5, window_bounds = array<i64: 8, 128>}]} {
    %c0 = arith.constant 0 : index
    %c0_0 = arith.constant 0 : index
    %0 = vector.load %arg1[%c0, %c0_0] : memref<8x128xf32, #tpu.memory_space<vmem>>, vector<8x128xf32>
    %c0_1 = arith.constant 0 : index
    %c0_2 = arith.constant 0 : index
    %1 = vector.load %arg2[%c0_1, %c0_2] : memref<128x128xf32, #tpu.memory_space<vmem>>, vector<128x128xf32>
    %cst = arith.constant dense<0.000000e+00> : vector<8x128xf32>
    %2 = tpu.matmul %0, %1, %cst {dimension_numbers = #tpu.dot_dimension_numbers<[1], [0], [0], [1], [0, 0, 1, 1], [], []>} : vector<8x128xf32>, vector<128x128xf32>, vector<8x128xf32> -> vector<8x128xf32>
    %c0_3 = arith.constant 0 : index
    %c0_4 = arith.constant 0 : index
    %3 = vector.load %arg3[%c0_3, %c0_4] : memref<1x128xf32, #tpu.memory_space<vmem>>, vector<1x128xf32>
    %4 = vector.broadcast %3 : vector<1x128xf32> to vector<8x128xf32>
    %5 = arith.addf %2, %4 : vector<8x128xf32>
    %6 = arith.mulf %5, %5 : vector<8x128xf32>
    %cst_5 = arith.constant 0.797884583 : f32
    %7 = vector.broadcast %cst_5 : f32 to vector<8x128xf32>
    %8 = arith.mulf %7, %5 : vector<8x128xf32>
    %cst_6 = arith.constant 4.471500e-02 : f32
    %9 = vector.broadcast %cst_6 : f32 to vector<8x128xf32>
    %10 = arith.mulf %9, %6 : vector<8x128xf32>
    %cst_7 = arith.constant 1.000000e+00 : f32
    %11 = vector.broadcast %cst_7 : f32 to vector<8x128xf32>
    %12 = arith.addf %11, %10 : vector<8x128xf32>
    %13 = arith.mulf %8, %12 : vector<8x128xf32>
    %14 = math.tanh %13 : vector<8x128xf32>
    %cst_8 = arith.constant 5.000000e-01 : f32
    %15 = vector.broadcast %cst_8 : f32 to vector<8x128xf32>
    %16 = arith.mulf %15, %14 : vector<8x128xf32>
    %cst_9 = arith.constant 5.000000e-01 : f32
    %17 = vector.broadcast %cst_9 : f32 to vector<8x128xf32>
    %18 = arith.addf %17, %16 : vector<8x128xf32>
    %19 = arith.mulf %5, %18 : vector<8x128xf32>
    %c0_10 = arith.constant 0 : index
    %c0_11 = arith.constant 0 : index
    %20 = vector.load %arg4[%c0_10, %c0_11] : memref<128x128xf32, #tpu.memory_space<vmem>>, vector<128x128xf32>
    %cst_12 = arith.constant dense<0.000000e+00> : vector<8x128xf32>
    %21 = tpu.matmul %19, %20, %cst_12 {dimension_numbers = #tpu.dot_dimension_numbers<[1], [0], [0], [1], [0, 0, 1, 1], [], []>} : vector<8x128xf32>, vector<128x128xf32>, vector<8x128xf32> -> vector<8x128xf32>
    %c0_13 = arith.constant 0 : index
    %c0_14 = arith.constant 0 : index
    %22 = vector.load %arg5[%c0_13, %c0_14] : memref<1x128xf32, #tpu.memory_space<vmem>>, vector<1x128xf32>
    %23 = vector.broadcast %22 : vector<1x128xf32> to vector<8x128xf32>
    %24 = arith.addf %21, %23 : vector<8x128xf32>
    %c0_15 = arith.constant 0 : index
    %c0_16 = arith.constant 0 : index
    %25 = vector.load %arg6[%c0_15, %c0_16] : memref<8x128xf32, #tpu.memory_space<vmem>>, vector<8x128xf32>
    tpu.vector_store %arg6[%c0_15, %c0_16], %24 {strides = array<i32>} : memref<8x128xf32, #tpu.memory_space<vmem>>, vector<8x128xf32>,
    return
  }
  func.func @transform_0(%arg0: i32) -> (i32, i32) {
    %c0_i32 = arith.constant 0 : i32
    %c0_i32_0 = arith.constant 0 : i32
    return %arg0, %c0_i32 : i32, i32
  }
  func.func @transform_1(%arg0: i32) -> (i32, i32) {
    %c0_i32 = arith.constant 0 : i32
    %c0_i32_0 = arith.constant 0 : i32
    %c0_i32_1 = arith.constant 0 : i32
    return %c0_i32, %c0_i32_0 : i32, i32
  }
  func.func @transform_2(%arg0: i32) -> (i32, i32) {
    %c0_i32 = arith.constant 0 : i32
    %c0_i32_0 = arith.constant 0 : i32
    %c0_i32_1 = arith.constant 0 : i32
    return %c0_i32, %c0_i32_0 : i32, i32
  }
  func.func @transform_3(%arg0: i32) -> (i32, i32) {
    %c0_i32 = arith.constant 0 : i32
    %c0_i32_0 = arith.constant 0 : i32
    %c0_i32_1 = arith.constant 0 : i32
    return %c0_i32, %c0_i32_0 : i32, i32
  }
  func.func @transform_4(%arg0: i32) -> (i32, i32) {
    %c0_i32 = arith.constant 0 : i32
    %c0_i32_0 = arith.constant 0 : i32
    %c0_i32_1 = arith.constant 0 : i32
    return %c0_i32, %c0_i32_0 : i32, i32
  }
  func.func @transform_5(%arg0: i32) -> (i32, i32) {
    %c0_i32 = arith.constant 0 : i32
    %c0_i32_0 = arith.constant 0 : i32
    return %arg0, %c0_i32 : i32, i32
  }
}

</mosaic_0001>

<llo_original>
// kernel: tpu_custom_call.1
$region0: #{tpu_custom_call.1}
  #allocation0 [shape = 'u32[]', space=smem, size = 0x4, offset = 0x4, fixed_abs, tag = 'smem constant byte address 0x4 - core index']
  #allocation1 [shape = 'u32[144,128]{1,0:T(1,128)}', space=vmem, size = 0x12000, scoped, tag = 'internal scratch']
  %s0 = inlined_call_operand.hbm [shape: f32[16,128], index: 0, kind: input, shape index: {}]
  %s1 = inlined_call_operand.hbm [shape: f32[128,128], index: 1, kind: input, shape index: {}]
  %s2 = inlined_call_operand.vmem [shape: f32[1,128], index: 2, kind: input, shape index: {}]
  %s3 = inlined_call_operand.hbm [shape: f32[128,128], index: 3, kind: input, shape index: {}]
  %s4 = inlined_call_operand.vmem [shape: f32[1,128], index: 4, kind: input, shape index: {}]
  %s5 = inlined_call_operand.hbm [shape: f32[16,128], index: 5, kind: output, shape index: {}]
  %s6 = sld [smem:[#allocation0]]
  $region65: #{tpu_custom_call.1} parent=0
    _
  %s8 = ssub.s32 1, %s6
  %s9 = scalar_select 0, %s8, %s6
  $region1: #{tpu_custom_call.1} parent=0
    #allocation2 [shape = 'u8[8192]{0}', space=vmem, size = 0x2000, scoped, tag = 'input window, operand 0']
    #allocation3 [shape = 's32[2]{0}', space=sflag, size = 0x8, scoped, tag = 'scoped memory for tpu_custom_call.1']
    #allocation4 [shape = 's32[2]{0}', space=sflag, size = 0x8, scoped, tag = 'scoped memory for tpu_custom_call.1']
    #allocation5 [shape = 'u8[65536]{0}', space=vmem, size = 0x10000, scoped, tag = 'input window, operand 1, single buffered']
    #allocation6 [shape = 's32[1]{0}', space=sflag, size = 0x4, scoped, tag = 'scoped memory for tpu_custom_call.1']
    #allocation7 [shape = 'u8[65536]{0}', space=vmem, size = 0x10000, scoped, tag = 'input window, operand 3, single buffered']
    #allocation8 [shape = 'u8[8192]{0}', space=vmem, size = 0x2000, scoped, tag = 'output window, operand 0']
    %10 = vsyncpa [#allocation3], 0
    %s11 = scalar_lea.sflag [#allocation3], 1
    %12 = vsyncpa %s11, 0
    %13 = vsyncpa [#allocation6], 0
    %14 = vsyncpa [#allocation4], 0
    %s15 = scalar_lea.sflag [#allocation4], 1
    %16 = vsyncpa %s15, 0
    loop: start=0, step=1, limit=4
    $region2: #{tpu_custom_call.1} parent=1 // loop_pre_header
      _
    $region3: #{tpu_custom_call.1} parent=1 // loop_header
      %s18 = sphi 0, %s22
      %p19 = scmp.ge.s32.totalorder %s18, 4
      %s28 = sphi 0, %s30
      %s31 = sphi 0, %s28
      %s32 = sphi 0, %s31
      %s48 = sphi 0, %s32
      %s52 = sphi 0, %s52
      %s54 = sphi 0, %s52
      %s55 = sphi 0, %s54
      %s69 = sphi 0, %s55
      %s73 = sphi 0, %s73
      %s75 = sphi 0, %s73
      %s76 = sphi 0, %s75
      %s90 = sphi 0, %s76
      %s94 = sphi 0, %s94
      %s96 = sphi 0, %s94
      %s97 = sphi 0, %s96
      %s111 = sphi 0, %s97
      %s115 = sphi 0, %s115
      %s117 = sphi 0, %s115
      %s118 = sphi 0, %s117
      %s132 = sphi 0, %s118
      %s138 = sphi 0, %s140
      %s141 = sphi 0, %s138
      %s142 = sphi 0, %s141
      %s158 = sphi 0, %s142
    $region4: #{tpu_custom_call.1} parent=1 // loop_header_branch
      %21 = sbr.rel (%p19) target = $region8
    $region5: #{tpu_custom_call.1} parent=1 // loop_body
      %s23 = ssub.s32 %s18, 1
      %s24 = ssub.s32 %s18, 2
      %s25 = sadd.s32 %s18, 1
      %s26 = ssub.s32 %s18, %s25
      %p27 = scmp.eq.s32.totalorder %s26, 0
      %s29 = sadd.s32 %s28, 1
      %s30 = scalar_select %p27, %s28, %s29
      %p33 = pneg %p27
      %p34 = scmp.eq.s32.totalorder %s18, 1
      %p35 = por %p33, %p34
      %p36 = scmp.ne.s32.totalorder %s28, %s31
      %p37 = scmp.eq.s32.totalorder %s18, 0
      %p38 = por %p36, %p37
      %p39 = scmp.ne.s32.totalorder %s28, %s31
      %p40 = scmp.eq.s32.totalorder %s23, 1
      %p41 = por %p39, %p40
      %p42 = scmp.ne.s32.totalorder %s31, %s32
      %p43 = scmp.eq.s32.totalorder %s23, 0
      %p44 = por %p42, %p43
      %p45 = scmp.ne.s32.totalorder %s31, %s32
      %p46 = scmp.eq.s32.totalorder %s24, 1
      %p47 = por %p45, %p46
      %p49 = scmp.ne.s32.totalorder %s32, %s48
      %p50 = scmp.eq.s32.totalorder %s24, 0
      %p51 = por %p49, %p50
      %s53 = sadd.s32 %s52, 1
      %p56 = scmp.eq.s32.totalorder %s18, 1
      %p57 = scmp.ne.s32.totalorder %s52, %s54
      %p58 = scmp.eq.s32.totalorder %s18, 0
      %p59 = por %p57, %p58
      %p60 = scmp.ne.s32.totalorder %s52, %s54
      %p61 = scmp.eq.s32.totalorder %s23, 1
      %p62 = por %p60, %p61
      %p63 = scmp.ne.s32.totalorder %s54, %s55
      %p64 = scmp.eq.s32.totalorder %s23, 0
      %p65 = por %p63, %p64
      %p66 = scmp.ne.s32.totalorder %s54, %s55
      %p67 = scmp.eq.s32.totalorder %s24, 1
      %p68 = por %p66, %p67
      %p70 = scmp.ne.s32.totalorder %s55, %s69
      %p71 = scmp.eq.s32.totalorder %s24, 0
      %p72 = por %p70, %p71
      %s74 = sadd.s32 %s73, 1
      %p77 = scmp.eq.s32.totalorder %s18, 1
      %p78 = scmp.ne.s32.totalorder %s73, %s75
      %p79 = scmp.eq.s32.totalorder %s18, 0
      %p80 = por %p78, %p79
      %p81 = scmp.ne.s32.totalorder %s73, %s75
      %p82 = scmp.eq.s32.totalorder %s23, 1
      %p83 = por %p81, %p82
      %p84 = scmp.ne.s32.totalorder %s75, %s76
      %p85 = scmp.eq.s32.totalorder %s23, 0
      %p86 = por %p84, %p85
      %p87 = scmp.ne.s32.totalorder %s75, %s76
      %p88 = scmp.eq.s32.totalorder %s24, 1
      %p89 = por %p87, %p88
      %p91 = scmp.ne.s32.totalorder %s76, %s90
      %p92 = scmp.eq.s32.totalorder %s24, 0
      %p93 = por %p91, %p92
      %s95 = sadd.s32 %s94, 1
      %p98 = scmp.eq.s32.totalorder %s18, 1
      %p99 = scmp.ne.s32.totalorder %s94, %s96
      %p100 = scmp.eq.s32.totalorder %s18, 0
      %p101 = por %p99, %p100
      %p102 = scmp.ne.s32.totalorder %s94, %s96
      %p103 = scmp.eq.s32.totalorder %s23, 1
      %p104 = por %p102, %p103
      %p105 = scmp.ne.s32.totalorder %s96, %s97
      %p106 = scmp.eq.s32.totalorder %s23, 0
      %p107 = por %p105, %p106
      %p108 = scmp.ne.s32.totalorder %s96, %s97
      %p109 = scmp.eq.s32.totalorder %s24, 1
      %p110 = por %p108, %p109
      %p112 = scmp.ne.s32.totalorder %s97, %s111
      %p113 = scmp.eq.s32.totalorder %s24, 0
      %p114 = por %p112, %p113
      %s116 = sadd.s32 %s115, 1
      %p119 = scmp.eq.s32.totalorder %s18, 1
      %p120 = scmp.ne.s32.totalorder %s115, %s117
      %p121 = scmp.eq.s32.totalorder %s18, 0
      %p122 = por %p120, %p121
      %p123 = scmp.ne.s32.totalorder %s115, %s117
      %p124 = scmp.eq.s32.totalorder %s23, 1
      %p125 = por %p123, %p124
      %p126 = scmp.ne.s32.totalorder %s117, %s118
      %p127 = scmp.eq.s32.totalorder %s23, 0
      %p128 = por %p126, %p127
      %p129 = scmp.ne.s32.totalorder %s117, %s118
      %p130 = scmp.eq.s32.totalorder %s24, 1
      %p131 = por %p129, %p130
      %p133 = scmp.ne.s32.totalorder %s118, %s132
      %p134 = scmp.eq.s32.totalorder %s24, 0
      %p135 = por %p133, %p134
      %s136 = ssub.s32 %s18, %s25
      %p137 = scmp.eq.s32.totalorder %s136, 0
      %s139 = sadd.s32 %s138, 1
      %s140 = scalar_select %p137, %s138, %s139
      %p143 = pneg %p137
      %p144 = scmp.eq.s32.totalorder %s18, 1
      %p145 = por %p143, %p144
      %p146 = scmp.ne.s32.totalorder %s138, %s141
      %p147 = scmp.eq.s32.totalorder %s18, 0
      %p148 = por %p146, %p147
      %p149 = scmp.ne.s32.totalorder %s138, %s141
      %p150 = scmp.eq.s32.totalorder %s23, 1
      %p151 = por %p149, %p150
      %p152 = scmp.ne.s32.totalorder %s141, %s142
      %p153 = scmp.eq.s32.totalorder %s23, 0
      %p154 = por %p152, %p153
      %p155 = scmp.ne.s32.totalorder %s141, %s142
      %p156 = scmp.eq.s32.totalorder %s24, 1
      %p157 = por %p155, %p156
      %p159 = scmp.ne.s32.totalorder %s142, %s158
      %p160 = scmp.eq.s32.totalorder %s24, 0
      %p161 = por %p159, %p160
      %p162 = scmp.le.s32.totalorder 1, %s18
      %p163 = scmp.lt.s32.totalorder %s18, 3
      %p164 = pnand %p162, %p163
      %p165 = pneg %p164
      // Predicated region
      $region9: #{tpu_custom_call.1} parent=5 // pred_check
        _
      $region10: #{tpu_custom_call.1} parent=5 // pred_check_branch
        %167 = sbr.rel (%p164) target = $region12
      $region11: #{tpu_custom_call.1} parent=5 // pred_region
        %s168 = ssub.s32 %s18, 1
        // Predicated region
        $region13: #{tpu_custom_call.1} parent=11 // pred_check
          %p169 = pneg %p65
        $region14: #{tpu_custom_call.1} parent=11 // pred_check_branch
          %171 = sbr.rel (%p169) target = $region16
        $region15: #{tpu_custom_call.1} parent=11 // pred_region
          %s173 = ssub.s32 2048, 2048
          %174 = vsyncadd [#allocation6], %s173
          %s175 = sshll.u32 [#allocation5], 4
          %s176 = int_to_ptr.vmem [resolvable:$true] %s175
          %181 = dma.hbm_to_vmem [thread:$0]  %s1, 2048, %s176, [#allocation6], 128, 128, 8
        $region16: #{tpu_custom_call.1} parent=11 // pred_fallthru
          _
        // Predicated region
        $region17: #{tpu_custom_call.1} parent=11 // pred_check
          %p182 = pneg %p86
        $region18: #{tpu_custom_call.1} parent=11 // pred_check_branch
          %184 = sbr.rel (%p182) target = $region20
        $region19: #{tpu_custom_call.1} parent=11 // pred_region
          _
        $region20: #{tpu_custom_call.1} parent=11 // pred_fallthru
          _
        // Predicated region
        $region21: #{tpu_custom_call.1} parent=11 // pred_check
          %p185 = pneg %p107
        $region22: #{tpu_custom_call.1} parent=11 // pred_check_branch
          %187 = sbr.rel (%p185) target = $region24
        $region23: #{tpu_custom_call.1} parent=11 // pred_region
          %s189 = ssub.s32 2048, 2048
          %190 = vsyncadd [#allocation6], %s189
          %s191 = sshll.u32 [#allocation7], 4
          %s192 = int_to_ptr.vmem [resolvable:$true] %s191
          %197 = dma.hbm_to_vmem [thread:$0]  %s3, 2048, %s192, [#allocation6], 128, 128, 8
        $region24: #{tpu_custom_call.1} parent=11 // pred_fallthru
          _
        // Predicated region
        $region25: #{tpu_custom_call.1} parent=11 // pred_check
          %p198 = pneg %p128
        $region26: #{tpu_custom_call.1} parent=11 // pred_check_branch
          %200 = sbr.rel (%p198) target = $region28
        $region27: #{tpu_custom_call.1} parent=11 // pred_region
          _
        $region28: #{tpu_custom_call.1} parent=11 // pred_fallthru
          _
      $region12: #{tpu_custom_call.1} parent=5 // pred_fallthru
        _
      %p201 = scmp.lt.s32.totalorder %s18, 2
      // Predicated region
      $region29: #{tpu_custom_call.1} parent=5 // pred_check
        %p202 = pneg %p201
      $region30: #{tpu_custom_call.1} parent=5 // pred_check_branch
        %204 = sbr.rel (%p202) target = $region32
      $region31: #{tpu_custom_call.1} parent=5 // pred_region
        // Predicated region
        $region33: #{tpu_custom_call.1} parent=31 // pred_check
          %p205 = pneg %p38
        $region34: #{tpu_custom_call.1} parent=31 // pred_check_branch
          %207 = sbr.rel (%p205) target = $region36
        $region35: #{tpu_custom_call.1} parent=31 // pred_region
          %s208 = sand.u32 %s28, 1
          %s209 = scalar_lea.sflag [#allocation3], %s208
          %s210 = sand.u32 %s28, 1
          %s211 = smul.addr %s210, 8
          %s212 = scalar_lea.vmem [#allocation2], %s211
          %s214 = ssub.s32 128, 128
          %215 = vsyncadd %s209, %s214
          %s216 = smul.addr %s18, 128
          %s217 = scalar_lea.hbm %s0, %s216
          %s219 = sshll.u32 %s212, 4
          %s220 = int_to_ptr.vmem [resolvable:$true] %s219
          %222 = dma.hbm_to_vmem [thread:$0]  %s217, 128, %s220, %s209
        $region36: #{tpu_custom_call.1} parent=31 // pred_fallthru
          _
      $region32: #{tpu_custom_call.1} parent=5 // pred_fallthru
        _
      %p223 = scmp.le.s32.totalorder 1, %s18
      %p224 = scmp.lt.s32.totalorder %s18, 3
      %p225 = pnand %p223, %p224
      %p226 = pneg %p225
      // Predicated region
      $region37: #{tpu_custom_call.1} parent=5 // pred_check
        _
      $region38: #{tpu_custom_call.1} parent=5 // pred_check_branch
        %228 = sbr.rel (%p225) target = $region40
      $region39: #{tpu_custom_call.1} parent=5 // pred_region
        %s229 = ssub.s32 %s18, 1
        %s230 = sand.u32 %s31, 1
        %s231 = scalar_lea.sflag [#allocation3], %s230
        %s232 = sand.u32 %s31, 1
        %s233 = smul.addr %s232, 8
        %s234 = scalar_lea.vmem [#allocation2], %s233
        // Predicated region
        $region41: #{tpu_custom_call.1} parent=39 // pred_check
          %p235 = pneg %p44
        $region42: #{tpu_custom_call.1} parent=39 // pred_check_branch
          %237 = sbr.rel (%p235) target = $region44
        $region43: #{tpu_custom_call.1} parent=39 // pred_region
          %238 = dma.done %s231, 128
        $region44: #{tpu_custom_call.1} parent=39 // pred_fallthru
          _
        // Predicated region
        $region45: #{tpu_custom_call.1} parent=39 // pred_check
          %p239 = pneg %p65
        $region46: #{tpu_custom_call.1} parent=39 // pred_check_branch
          %241 = sbr.rel (%p239) target = $region48
        $region47: #{tpu_custom_call.1} parent=39 // pred_region
          %242 = dma.done [#allocation6], 2048
        $region48: #{tpu_custom_call.1} parent=39 // pred_fallthru
          _
        // Predicated region
        $region49: #{tpu_custom_call.1} parent=39 // pred_check
          %p243 = pneg %p107
        $region50: #{tpu_custom_call.1} parent=39 // pred_check_branch
          %245 = sbr.rel (%p243) target = $region52
        $region51: #{tpu_custom_call.1} parent=39 // pred_region
          %246 = dma.done [#allocation6], 2048
        $region52: #{tpu_custom_call.1} parent=39 // pred_fallthru
          _
        %s247 = sand.u32 %s31, 1
        %s248 = scalar_lea.sflag [#allocation3], %s247
        %s249 = sand.u32 %s31, 1
        %s250 = smul.addr %s249, 8
        %s251 = scalar_lea.vmem [#allocation2], %s250
        %p252 = pneg %p44
        %p253 = pneg %p41
        %p254 = pneg %p65
        %p255 = pneg %p62
        %p256 = pneg %p86
        %p257 = pneg %p83
        %p258 = pneg %p107
        %p259 = pneg %p104
        %p260 = pneg %p128
        %p261 = pneg %p125
        %p262 = pneg %p154
        %p263 = pneg %p151
        %s264 = sand.u32 %s141, 1
        %s265 = scalar_lea.sflag [#allocation4], %s264
        %s266 = sand.u32 %s141, 1
        %s267 = smul.addr %s266, 8
        %s268 = scalar_lea.vmem [#allocation8], %s267
        %v269 = vld [vmem:[%s234] sm:$0xff]
        %v270 = vld [vmem:[#allocation5] sm:$0xff]
        %v271 = vld [vmem:[#allocation5 + $0x8] sm:$0xff]
        %v272 = vld [vmem:[#allocation5 + $0x10] sm:$0xff]
        %v273 = vld [vmem:[#allocation5 + $0x18] sm:$0xff]
        %v274 = vld [vmem:[#allocation5 + $0x20] sm:$0xff]
        %v275 = vld [vmem:[#allocation5 + $0x28] sm:$0xff]
        %v276 = vld [vmem:[#allocation5 + $0x30] sm:$0xff]
        %v277 = vld [vmem:[#allocation5 + $0x38] sm:$0xff]
        %v278 = vld [vmem:[#allocation5 + $0x40] sm:$0xff]
        %v279 = vld [vmem:[#allocation5 + $0x48] sm:$0xff]
        %v280 = vld [vmem:[#allocation5 + $0x50] sm:$0xff]
        %v281 = vld [vmem:[#allocation5 + $0x58] sm:$0xff]
        %v282 = vld [vmem:[#allocation5 + $0x60] sm:$0xff]
        %v283 = vld [vmem:[#allocation5 + $0x68] sm:$0xff]
        %v284 = vld [vmem:[#allocation5 + $0x70] sm:$0xff]
        %v285 = vld [vmem:[#allocation5 + $0x78] sm:$0xff]
        %v286 = vld [vmem:[%s2] sm:$0x1]
        %v288 = vlaneseq
        %v289 = vshrl.u32 %v288, 7
        %v290 = vsub.s32 0, %v289
        %v291 = vrot.slane %v286, %v290
        %293 = vmatprep.subr.mxu0 0.0
        %294 = vmatpush1.msra.mxu0 %v270
        %295 = vmatprep.subr.mxu0 0.0
        %296 = vmatpush1.msra.mxu0 %v271
        %297 = vmatprep.subr.mxu0 0.0
        %298 = vmatpush1.msra.mxu0 %v272
        %299 = vmatprep.subr.mxu0 0.0
        %300 = vmatpush1.msra.mxu0 %v273
        %301 = vmatprep.subr.mxu0 0.0
        %302 = vmatpush1.msra.mxu0 %v274
        %303 = vmatprep.subr.mxu0 0.0
        %304 = vmatpush1.msra.mxu0 %v275
        %305 = vmatprep.subr.mxu0 0.0
        %306 = vmatpush1.msra.mxu0 %v276
        %307 = vmatprep.subr.mxu0 0.0
        %308 = vmatpush1.msra.mxu0 %v277
        %309 = vmatprep.subr.mxu0 0.0
        %310 = vmatpush1.msra.mxu0 %v278
        %311 = vmatprep.subr.mxu0 0.0
        %312 = vmatpush1.msra.mxu0 %v279
        %313 = vmatprep.subr.mxu0 0.0
        %314 = vmatpush1.msra.mxu0 %v280
        %315 = vmatprep.subr.mxu0 0.0
        %316 = vmatpush1.msra.mxu0 %v281
        %317 = vmatprep.subr.mxu0 0.0
        %318 = vmatpush1.msra.mxu0 %v282
        %319 = vmatprep.subr.mxu0 0.0
        %320 = vmatpush1.msra.mxu0 %v283
        %321 = vmatprep.subr.mxu0 0.0
        %322 = vmatpush1.msra.mxu0 %v284
        %323 = vmatprep.subr.mxu0 0.0
        %324 = vmatpush1.msra.mxu0 %v285
        %325 = vmatprep.subr.mxu0 0.0
        %326 = vmatpush1.msra.mxu0 0.0
        %327 = vmatprep.subr.mxu0 0.0
        %328 = vmatpush1.msra.mxu0 0.0
        %329 = vmatprep.subr.mxu0 0.0
        %330 = vmatpush1.msra.mxu0 0.0
        %331 = vmatprep.subr.mxu0 0.0
        %332 = vmatpush1.msra.mxu0 0.0
        %333 = vmatprep.subr.mxu0 0.0
        %334 = vmatpush1.msra.mxu0 0.0
        %335 = vmatprep.subr.mxu0 0.0
        %336 = vmatpush1.msra.mxu0 0.0
        %337 = vmatprep.subr.mxu0 0.0
        %338 = vmatpush1.msra.mxu0 0.0
        %339 = vmatprep.subr.mxu0 0.0
        %340 = vmatpush1.msra.mxu0 0.0
        %341 = vmatprep.subr.mxu0 0.0
        %342 = vmatpush1.msra.mxu0 0.0
        %343 = vmatprep.subr.mxu0 0.0
        %344 = vmatpush1.msra.mxu0 0.0
        %345 = vmatprep.subr.mxu0 0.0
        %346 = vmatpush1.msra.mxu0 0.0
        %347 = vmatprep.subr.mxu0 0.0
        %348 = vmatpush1.msra.mxu0 0.0
        %349 = vmatprep.subr.mxu0 0.0
        %350 = vmatpush1.msra.mxu0 0.0
        %351 = vmatprep.subr.mxu0 0.0
        %352 = vmatpush1.msra.mxu0 0.0
        %353 = vmatprep.subr.mxu0 0.0
        %354 = vmatpush1.msra.mxu0 0.0
        %355 = vmatprep.subr.mxu0 0.0
        %356 = vmatpush1.msra.mxu0 0.0
        %357 = vmatprep.mubr.f32.mxu0 0.0
        %358 = vmatmul.mubr.f32.gmra.mrb[0].mxu0 %v269
        %v359 = vpop.f32.mrb[0].mxu0
        %v360 = vadd.f32 %v291, %v359
        %v361 = vpop.f32.mrb[0].mxu0
        %362 = vdwg.mxu0
        %v363 = vmul.f32 %v360, %v360
        %v364 = vmul.f32 %v360, 0.7978846
        %v365 = vmul.f32 %v363, 0.044715
        %v366 = vadd.f32 %v365, 1.0
        %v367 = vmul.f32 %v364, %v366
        %v368 = vtanh.pop %v367
        %v369 = vmul.f32 %v368, 0.5
        %v370 = vadd.f32 %v369, 0.5
        %v371 = vmul.f32 %v360, %v370
        %v372 = vld [vmem:[#allocation7] sm:$0xff]
        %v373 = vld [vmem:[#allocation7 + $0x8] sm:$0xff]
        %v374 = vld [vmem:[#allocation7 + $0x10] sm:$0xff]
        %v375 = vld [vmem:[#allocation7 + $0x18] sm:$0xff]
        %v376 = vld [vmem:[#allocation7 + $0x20] sm:$0xff]
        %v377 = vld [vmem:[#allocation7 + $0x28] sm:$0xff]
        %v378 = vld [vmem:[#allocation7 + $0x30] sm:$0xff]
        %v379 = vld [vmem:[#allocation7 + $0x38] sm:$0xff]
        %v380 = vld [vmem:[#allocation7 + $0x40] sm:$0xff]
        %v381 = vld [vmem:[#allocation7 + $0x48] sm:$0xff]
        %v382 = vld [vmem:[#allocation7 + $0x50] sm:$0xff]
        %v383 = vld [vmem:[#allocation7 + $0x58] sm:$0xff]
        %v384 = vld [vmem:[#allocation7 + $0x60] sm:$0xff]
        %v385 = vld [vmem:[#allocation7 + $0x68] sm:$0xff]
        %v386 = vld [vmem:[#allocation7 + $0x70] sm:$0xff]
        %v387 = vld [vmem:[#allocation7 + $0x78] sm:$0xff]
        %v388 = vld [vmem:[%s4] sm:$0x1]
        %v390 = vlaneseq
        %v391 = vshrl.u32 %v390, 7
        %v392 = vsub.s32 0, %v391
        %v393 = vrot.slane %v388, %v392
        %395 = vmatprep.subr.mxu0 0.0
        %396 = vmatpush1.msra.mxu0 %v372
        %397 = vmatprep.subr.mxu0 0.0
        %398 = vmatpush1.msra.mxu0 %v373
        %399 = vmatprep.subr.mxu0 0.0
        %400 = vmatpush1.msra.mxu0 %v374
        %401 = vmatprep.subr.mxu0 0.0
        %402 = vmatpush1.msra.mxu0 %v375
        %403 = vmatprep.subr.mxu0 0.0
        %404 = vmatpush1.msra.mxu0 %v376
        %405 = vmatprep.subr.mxu0 0.0
        %406 = vmatpush1.msra.mxu0 %v377
        %407 = vmatprep.subr.mxu0 0.0
        %408 = vmatpush1.msra.mxu0 %v378
        %409 = vmatprep.subr.mxu0 0.0
        %410 = vmatpush1.msra.mxu0 %v379
        %411 = vmatprep.subr.mxu0 0.0
        %412 = vmatpush1.msra.mxu0 %v380
        %413 = vmatprep.subr.mxu0 0.0
        %414 = vmatpush1.msra.mxu0 %v381
        %415 = vmatprep.subr.mxu0 0.0
        %416 = vmatpush1.msra.mxu0 %v382
        %417 = vmatprep.subr.mxu0 0.0
        %418 = vmatpush1.msra.mxu0 %v383
        %419 = vmatprep.subr.mxu0 0.0
        %420 = vmatpush1.msra.mxu0 %v384
        %421 = vmatprep.subr.mxu0 0.0
        %422 = vmatpush1.msra.mxu0 %v385
        %423 = vmatprep.subr.mxu0 0.0
        %424 = vmatpush1.msra.mxu0 %v386
        %425 = vmatprep.subr.mxu0 0.0
        %426 = vmatpush1.msra.mxu0 %v387
        %427 = vmatprep.subr.mxu0 0.0
        %428 = vmatpush1.msra.mxu0 0.0
        %429 = vmatprep.subr.mxu0 0.0
        %430 = vmatpush1.msra.mxu0 0.0
        %431 = vmatprep.subr.mxu0 0.0
        %432 = vmatpush1.msra.mxu0 0.0
        %433 = vmatprep.subr.mxu0 0.0
        %434 = vmatpush1.msra.mxu0 0.0
        %435 = vmatprep.subr.mxu0 0.0
        %436 = vmatpush1.msra.mxu0 0.0
        %437 = vmatprep.subr.mxu0 0.0
        %438 = vmatpush1.msra.mxu0 0.0
        %439 = vmatprep.subr.mxu0 0.0
        %440 = vmatpush1.msra.mxu0 0.0
        %441 = vmatprep.subr.mxu0 0.0
        %442 = vmatpush1.msra.mxu0 0.0
        %443 = vmatprep.subr.mxu0 0.0
        %444 = vmatpush1.msra.mxu0 0.0
        %445 = vmatprep.subr.mxu0 0.0
        %446 = vmatpush1.msra.mxu0 0.0
        %447 = vmatprep.subr.mxu0 0.0
        %448 = vmatpush1.msra.mxu0 0.0
        %449 = vmatprep.subr.mxu0 0.0
        %450 = vmatpush1.msra.mxu0 0.0
        %451 = vmatprep.subr.mxu0 0.0
        %452 = vmatpush1.msra.mxu0 0.0
        %453 = vmatprep.subr.mxu0 0.0
        %454 = vmatpush1.msra.mxu0 0.0
        %455 = vmatprep.subr.mxu0 0.0
        %456 = vmatpush1.msra.mxu0 0.0
        %457 = vmatprep.subr.mxu0 0.0
        %458 = vmatpush1.msra.mxu0 0.0
        %459 = vmatprep.mubr.f32.mxu0 0.0
        %460 = vmatmul.mubr.f32.gmra.mrb[0].mxu0 %v371
        %v461 = vpop.f32.mrb[0].mxu0
        %v462 = vadd.f32 %v393, %v461
        %v463 = vpop.f32.mrb[0].mxu0
        %464 = vdwg.mxu0
        %465 = vst [vmem:[%s268] sm:$0xff] %v462
        %s466 = sand.u32 %s141, 1
        %s467 = scalar_lea.sflag [#allocation4], %s466
        %s468 = sand.u32 %s141, 1
        %s469 = smul.addr %s468, 8
        %s470 = scalar_lea.vmem [#allocation8], %s469
        // Predicated region
        $region53: #{tpu_custom_call.1} parent=39 // pred_check
          %p471 = pneg %p151
        $region54: #{tpu_custom_call.1} parent=39 // pred_check_branch
          %473 = sbr.rel (%p471) target = $region56
        $region55: #{tpu_custom_call.1} parent=39 // pred_region
          %s475 = ssub.s32 128, 128
          %476 = vsyncadd %s467, %s475
          %s477 = smul.addr %s23, 128
          %s478 = scalar_lea.hbm %s5, %s477
          %s480 = sshll.u32 %s470, 4
          %s481 = int_to_ptr.vmem [resolvable:$true] %s480
          %483 = dma.vmem_to_hbm [thread:$0]  %s481, 128, %s478, %s467
        $region56: #{tpu_custom_call.1} parent=39 // pred_fallthru
          _
      $region40: #{tpu_custom_call.1} parent=5 // pred_fallthru
        _
      %p484 = scmp.le.s32.totalorder 2, %s18
      // Predicated region
      $region57: #{tpu_custom_call.1} parent=5 // pred_check
        %p485 = pneg %p484
      $region58: #{tpu_custom_call.1} parent=5 // pred_check_branch
        %487 = sbr.rel (%p485) target = $region60
      $region59: #{tpu_custom_call.1} parent=5 // pred_region
        %s488 = ssub.s32 %s18, 2
        // Predicated region
        $region61: #{tpu_custom_call.1} parent=59 // pred_check
          %p489 = pneg %p157
        $region62: #{tpu_custom_call.1} parent=59 // pred_check_branch
          %491 = sbr.rel (%p489) target = $region64
        $region63: #{tpu_custom_call.1} parent=59 // pred_region
          %s492 = sand.u32 %s142, 1
          %s493 = scalar_lea.sflag [#allocation4], %s492
          %s494 = sand.u32 %s142, 1
          %s495 = smul.addr %s494, 8
          %s496 = scalar_lea.vmem [#allocation8], %s495
          %497 = dma.done %s493, 128
        $region64: #{tpu_custom_call.1} parent=59 // pred_fallthru
          _
      $region60: #{tpu_custom_call.1} parent=5 // pred_fallthru
        _
    $region6: #{tpu_custom_call.1} parent=1 // loop_footer
      %s22 = sadd.s32 1, %s18
    $region7: #{tpu_custom_call.1} parent=1 // loop_footer_branch
      %17 = sbr.rel target = $region3
    $region8: #{tpu_custom_call.1} parent=1 // loop_exit
      _
    %498 = vsyncpa [#allocation3], 1
    %s499 = scalar_lea.sflag [#allocation3], 1
    %500 = vsyncpa %s499, 1
    %501 = vsyncpa [#allocation6], 1
    %502 = vsyncpa [#allocation4], 1
    %s503 = scalar_lea.sflag [#allocation4], 1
    %504 = vsyncpa %s503, 1

</llo_original>
